<compile_context>
chip_gen: v5e
topology: v5e:2x2
jax: 0.10.0
libtpu: 0.0.40
codegen_flags: <defaults>
</compile_context>

<pallas_src>
import jax
import jax.numpy as jnp
from jax.experimental import pallas as pl
from jax.experimental.pallas import tpu as pltpu


def _linear_kernel(xT_ref, w_ref, b_ref, o_ref):
    # xT_ref: (F, TILE_B) VMEM  -- batch along the 128-lane axis
    # w_ref : (F, 1)      VMEM  -- weight column, broadcasts over lanes
    # b_ref : (1,)        SMEM  -- scalar bias
    # o_ref : (1, TILE_B) VMEM  -- lane-dense output row
    xT = xT_ref[...]                  # (F, TILE_B)
    w = w_ref[...]                    # (F, 1)
    b = b_ref[0]                      # scalar

    # VPU elementwise multiply (full lane utilization) + sublane reduce.
    # Result is natively (1, TILE_B) lane-major: no relayout before the store.
    y = jnp.sum(xT * w, axis=0, keepdims=True) + b
    o_ref[...] = y.astype(o_ref.dtype)


def regression_model_forward(
    x: jax.Array, w: jax.Array, b: jax.Array, *, tile_b: int = 512
) -> jax.Array:
    """y = x @ W.T + b for out_features == 1 as a Pallas TPU kernel.

    x: (B, F) float32; w: (1, F) float32 (PyTorch nn.Linear weight layout with
    O=1); b: (1,) float32.  Returns (B, 1), matching nn.Linear's output.
    """
    B, F = x.shape
    O, F2 = w.shape
    assert F == F2 and O == 1, "kernel specialised for out_features == 1"

    # Data-prep transposes (cheap, outside the kernel): batch onto lanes.
    xT = x.T          # (F, B)
    w_col = w.T       # (F, 1)

    if B >= tile_b and B % tile_b == 0:
        # Scaling path: lane-aligned TILE_B (multiple of 128) => unmasked
        # lane-dense output stores; "parallel" B axis shards across v7x's
        # 2 TensorCores; explicit vmem_limit_bytes covers v5e's 16 MiB
        # scoped default while staying under v7x's 64 MiB physical VMEM.
        grid = (B // tile_b,)
        y_row = pl.pallas_call(
            _linear_kernel,
            out_shape=jax.ShapeDtypeStruct((1, B), x.dtype),
            grid=grid,
            in_specs=[
                pl.BlockSpec((F, tile_b), lambda i: (0, i)),              # xT tile
                pl.BlockSpec((F, 1), lambda i: (0, 0)),                   # w column
                pl.BlockSpec(memory_space=pltpu.MemorySpace.SMEM),        # bias
            ],
            out_specs=pl.BlockSpec((1, tile_b), lambda i: (0, i)),
            compiler_params=pltpu.CompilerParams(
                dimension_semantics=("parallel",),
                vmem_limit_bytes=32 * 1024 * 1024,
            ),
        )(xT, w_col, b)
    else:
        # Tiny-batch path: one invocation, whole arrays resident in VMEM.
        # At this size the call is launch/DMA-overhead bound; no grid or
        # double-buffering is worth its per-step cost.
        y_row = pl.pallas_call(
            _linear_kernel,
            out_shape=jax.ShapeDtypeStruct((1, B), x.dtype),
            in_specs=[
                pl.BlockSpec(memory_space=pltpu.MemorySpace.VMEM),        # xT
                pl.BlockSpec(memory_space=pltpu.MemorySpace.VMEM),        # w column
                pl.BlockSpec(memory_space=pltpu.MemorySpace.SMEM),        # bias
            ],
            out_specs=pl.BlockSpec(memory_space=pltpu.MemorySpace.VMEM),
        )(xT, w_col, b)

    # (1, B) -> (B, 1): identical row-major data order => metadata-only reshape.
    return y_row.reshape(B, O)


def init_params(key, in_features: int, out_features: int):
    """Deterministic parameter init mimicking nn.Linear's uniform init."""
    kw, kb = jax.random.split(key)
    bound = 1.0 / jnp.sqrt(jnp.float32(in_features))
    w = jax.random.uniform(
        kw, (out_features, in_features), jnp.float32, minval=-bound, maxval=bound
    )
    b = jax.random.uniform(
        kb, (out_features,), jnp.float32, minval=-bound, maxval=bound
    )
    return w, b


if __name__ == "__main__":
    key = jax.random.PRNGKey(0)
    k_x, k_p, k_big = jax.random.split(key, 3)

    F, O = 8, 1

    # --- Small-batch path (the Lab 3 shape): single no-grid invocation. ---
    B_small = 16
    x_small = jax.random.normal(k_x, (B_small, F), jnp.float32)
    w, b = init_params(k_p, F, O)

    y_small = regression_model_forward(x_small, w, b)
    jax.block_until_ready(y_small)
    ref_small = x_small @ w.T + b[None, :]
    assert y_small.shape == (B_small, O)
    assert jnp.allclose(y_small, ref_small, atol=1e-5, rtol=1e-5)

    # --- Scaling path: lane-aligned tiles, parallel B grid axis. ---
    B_big = 1024
    x_big = jax.random.normal(k_big, (B_big, F), jnp.float32)
    y_big = regression_model_forward(x_big, w, b, tile_b=512)
    jax.block_until_ready(y_big)
    ref_big = x_big @ w.T + b[None, :]
    assert y_big.shape == (B_big, O)
    assert jnp.allclose(y_big, ref_big, atol=1e-5, rtol=1e-5)

    print("KERNEL_OK")
</pallas_src>

<mosaic_0001>
module attributes {stable_mosaic.version = 11 : i64} {
  func.func @_linear_kernel(%arg0: memref<8x16xf32, #tpu.memory_space<vmem>>, %arg1: memref<8x1xf32, #tpu.memory_space<vmem>>, %arg2: memref<1xf32, #tpu.memory_space<smem>>, %arg3: memref<1x16xf32, #tpu.memory_space<vmem>>) attributes {dimension_semantics = [], scalar_prefetch = 0 : i64, scratch_operands = 0 : i64, tpu.core_type = #tpu.core_type<tc>} {
    %c0 = arith.constant 0 : index
    %c0_0 = arith.constant 0 : index
    %0 = vector.load %arg0[%c0, %c0_0] : memref<8x16xf32, #tpu.memory_space<vmem>>, vector<8x16xf32>
    %c0_1 = arith.constant 0 : index
    %c0_2 = arith.constant 0 : index
    %1 = vector.load %arg1[%c0_1, %c0_2] : memref<8x1xf32, #tpu.memory_space<vmem>>, vector<8x1xf32>
    %c0_3 = arith.constant 0 : index
    %2 = memref.load %arg2[%c0_3] : memref<1xf32, #tpu.memory_space<smem>>
    %3 = vector.broadcast %1 : vector<8x1xf32> to vector<8x16xf32>
    %4 = arith.mulf %0, %3 : vector<8x16xf32>
    %cst = arith.constant dense<0.000000e+00> : vector<16xf32>
    %5 = vector.multi_reduction <add>, %4, %cst [0] : vector<8x16xf32> to vector<16xf32>
    %6 = vector.shape_cast %5 : vector<16xf32> to vector<1x16xf32>
    %7 = vector.broadcast %2 : f32 to vector<1x16xf32>
    %8 = arith.addf %6, %7 : vector<1x16xf32>
    %c0_4 = arith.constant 0 : index
    %c0_5 = arith.constant 0 : index
    %9 = vector.load %arg3[%c0_4, %c0_5] : memref<1x16xf32, #tpu.memory_space<vmem>>, vector<1x16xf32>
    tpu.vector_store %arg3[%c0_4, %c0_5], %8 {strides = array<i32>} : memref<1x16xf32, #tpu.memory_space<vmem>>, vector<1x16xf32>,
    return
  }
}

</mosaic_0001>

<llo_original>
// kernel: tpu_custom_call.1
$region0: #{tpu_custom_call.1}
  #allocation0 [shape = 'u32[]', space=smem, size = 0x4, offset = 0x4, fixed_abs, tag = 'smem constant byte address 0x4 - core index']
  #allocation1 [shape = 'u32[72,128]{1,0:T(1,128)}', space=vmem, size = 0x9000, scoped, tag = 'internal scratch']
  #allocation2 [shape = 'f32[1]{0:T(128)S(6)}', space=smem, size = 0x200, scoped, tag = 'scoped memory for tpu_custom_call.1']
  %s0 = inlined_call_operand.vmem [shape: f32[8,16], index: 0, kind: input, shape index: {}]
  %s1 = inlined_call_operand.vmem [shape: f32[8,1], index: 1, kind: input, shape index: {}]
  %s2 = inlined_call_operand.<no memory space> [shape: f32[1], index: 2, kind: input, shape index: {}]
  %s3 = inlined_call_operand.hbm [shape: f32[1,16], index: 3, kind: output, shape index: {}]
  %s4 = sld [smem:[#allocation0]]
  $region22: #{tpu_custom_call.1} parent=0
    _
  %s6 = ssub.s32 1, %s4
  %s7 = scalar_select 0, %s6, %s4
  %8 = sst [smem:[#allocation2]] %s2
  $region1: #{tpu_custom_call.1} parent=0
    #allocation3 [shape = 'u8[512]{0}', space=vmem, size = 0x400, scoped, tag = 'output window, operand 0, single buffered']
    #allocation4 [shape = 's32[1]{0}', space=sflag, size = 0x4, scoped, tag = 'scoped memory for tpu_custom_call.1']
    %9 = vsyncpa [#allocation4], 0
    // Predicated region
    $region2: #{tpu_custom_call.1} parent=1 // pred_check
      _
    $region3: #{tpu_custom_call.1} parent=1 // pred_check_branch
      %11 = sbr.rel (0) target = $region5
    $region4: #{tpu_custom_call.1} parent=1 // pred_region
      _
    $region5: #{tpu_custom_call.1} parent=1 // pred_fallthru
      _
    // Predicated region
    $region6: #{tpu_custom_call.1} parent=1 // pred_check
      _
    $region7: #{tpu_custom_call.1} parent=1 // pred_check_branch
      %13 = sbr.rel (0) target = $region9
    $region8: #{tpu_custom_call.1} parent=1 // pred_region
      _
    $region9: #{tpu_custom_call.1} parent=1 // pred_fallthru
      _
    // Predicated region
    $region10: #{tpu_custom_call.1} parent=1 // pred_check
      _
    $region11: #{tpu_custom_call.1} parent=1 // pred_check_branch
      %15 = sbr.rel (0) target = $region13
    $region12: #{tpu_custom_call.1} parent=1 // pred_region
      _
    $region13: #{tpu_custom_call.1} parent=1 // pred_fallthru
      _
    %v16 = vld [vmem:[%s0] sm:$0xff]
    %v17 = vld [vmem:[%s1] sm:$0xff]
    %s18 = sld [smem:[#allocation2]]
    %20 = vset.pattern.permute.xlu0 0
    %21 = vperm.xlu0 %20, %v17
    %v22 = vpop.permute.xlu0 %21
    %v24 = vmul.f32 %v16, %v22
    %vm25 = vcmask 130048
    %v26 = vsel %vm25, %v24, 0.0
    %v27 = vrot.slane %v26, 4
    %v28 = vadd.f32 %v26, %v27
    %v29 = vrot.slane %v28, 2
    %v30 = vadd.f32 %v28, %v29
    %v31 = vrot.slane %v30, 1
    %v32 = vadd.f32 %v30, %v31
    %v33 = vstv %s18
    %v34 = vadd.f32 %v32, %v33
    %vm35 = vcmask 122880
    %36 = vst.msk [vmem:[#allocation3] sm:$0x1] %vm35, %v34
    // Predicated region
    $region14: #{tpu_custom_call.1} parent=1 // pred_check
      _
    $region15: #{tpu_custom_call.1} parent=1 // pred_check_branch
      %38 = sbr.rel (0) target = $region17
    $region16: #{tpu_custom_call.1} parent=1 // pred_region
      %40 = vsyncadd [#allocation4], 0
      %s42 = sshll.u32 [#allocation3], 4
      %s43 = int_to_ptr.vmem [resolvable:$true] %s42
      %s44 = sshll.u32 %s3, 4
      %s45 = int_to_ptr.hbm [resolvable:$true] %s44
      %47 = dma.vmem_to_hbm [thread:$0]  %s43, 16, %s45, [#allocation4]
    $region17: #{tpu_custom_call.1} parent=1 // pred_fallthru
      _
    // Predicated region
    $region18: #{tpu_custom_call.1} parent=1 // pred_check
      _
    $region19: #{tpu_custom_call.1} parent=1 // pred_check_branch
      %49 = sbr.rel (0) target = $region21
    $region20: #{tpu_custom_call.1} parent=1 // pred_region
      %51 = dma.done [#allocation4], 16
    $region21: #{tpu_custom_call.1} parent=1 // pred_fallthru
      _
    %52 = vsyncpa [#allocation4], 1

</llo_original>
